<compile_context>
chip_gen: v5e
topology: v5e:2x2
jax: 0.10.0
libtpu: 0.0.40
codegen_flags: <defaults>
</compile_context>

<pallas_src>
import jax
import jax.numpy as jnp
from jax.experimental import pallas as pl
from jax.experimental.pallas import tpu as pltpu


def _make_clamp_kernel(min_val, max_val):
    """Kernel body: pure elementwise clamp on the VPU, bounds as immediates."""

    def kernel(x_ref, o_ref):
        o_ref[...] = jnp.clip(x_ref[...], min_val, max_val)

    return kernel


def _sublane_multiple(dtype):
    # 8 for f32, 16 for bf16, 32 for int8 / fp8 (sub-32-bit packs along sublanes).
    itemsize = jnp.dtype(dtype).itemsize
    return max(8, 32 // max(itemsize, 1))


_SMALL_BYTES = 2 * 1024 * 1024          # single-block fast-path threshold
_TARGET_BLOCK_BYTES = 4 * 1024 * 1024   # ~4 MiB blocks -> ~16 MiB VMEM w/ 2x buffering


def clamp_pallas(x, min_val, max_val):
    """Elementwise clamp via a Pallas TPU kernel. Any shape, returns same shape/dtype."""
    orig_shape = x.shape
    dtype = x.dtype
    itemsize = jnp.dtype(dtype).itemsize
    n = x.size

    # Bake the bounds as Python scalar immediates of the right kind.
    # (For low-precision float dtypes the bounds round to that dtype — expected.)
    if jnp.issubdtype(dtype, jnp.floating):
        lo, hi = float(min_val), float(max_val)
    else:
        lo, hi = int(min_val), int(max_val)
    kernel = _make_clamp_kernel(lo, hi)

    # ---------------- Small-input fast path: one block, no grid, no padding.
    if n * itemsize <= _SMALL_BYTES:
        x2 = x if x.ndim >= 2 else x.reshape(1, -1)
        out = pl.pallas_call(
            kernel,
            out_shape=jax.ShapeDtypeStruct(x2.shape, dtype),
        )(x2)
        return out.reshape(orig_shape)

    # ---------------- Streaming path: lane-dense 2D slab with big blocks.
    # Widest lane count that divides n -> no pad pass in the common case.
    lane = None
    for cand in (1024, 512, 256, 128):
        if n % cand == 0:
            lane = cand
            break
    if lane is None:
        lane = 512

    rows = pl.cdiv(n, lane)
    padded_n = rows * lane
    x_flat = x.reshape(-1)
    if padded_n != n:
        # Single pad pass (< lane elements of waste); tail is sliced off below.
        x_flat = jnp.pad(x_flat, (0, padded_n - n))
    x2d = x_flat.reshape(rows, lane)

    # Block rows sized so the block is ~TARGET_BLOCK_BYTES, kept a multiple of the
    # dtype's sublane requirement. Ragged last tile handled by the grid (cdiv).
    sub = _sublane_multiple(dtype)
    tile_rows = max(sub, (_TARGET_BLOCK_BYTES // (lane * itemsize)) // sub * sub)
    tile_rows = min(tile_rows, pl.cdiv(rows, sub) * sub)

    grid = (pl.cdiv(rows, tile_rows),)

    out = pl.pallas_call(
        kernel,
        out_shape=jax.ShapeDtypeStruct((rows, lane), dtype),
        grid=grid,
        in_specs=[pl.BlockSpec((tile_rows, lane), lambda i: (i, 0))],
        out_specs=pl.BlockSpec((tile_rows, lane), lambda i: (i, 0)),
        compiler_params=pltpu.CompilerParams(
            dimension_semantics=("parallel",),
            vmem_limit_bytes=32 * 1024 * 1024,  # raises v5e's 16 MiB scoped default
        ),
    )(x2d)

    if padded_n != n:
        return out.reshape(-1)[:n].reshape(orig_shape)
    return out.reshape(orig_shape)


if __name__ == "__main__":
    # Clamp module has no learnable parameters; min/max are constructor args.
    clamp_min, clamp_max = -0.5, 0.5

    key = jax.random.PRNGKey(0)

    # Small case (exercises the single-block fast path), NCHW like the module.
    x_small = jax.random.normal(key, (2, 4, 16, 16), dtype=jnp.float32)
    y_small = jax.block_until_ready(clamp_pallas(x_small, clamp_min, clamp_max))
    ref_small = jnp.clip(x_small, clamp_min, clamp_max)
    assert y_small.shape == x_small.shape and y_small.dtype == x_small.dtype
    assert jnp.allclose(y_small, ref_small), "small-path mismatch vs reference clamp"

    # Larger case (exercises the gridded streaming path with ~4 MiB blocks).
    x_big = jax.random.normal(jax.random.PRNGKey(1), (8, 64, 64, 64), dtype=jnp.float32)
    y_big = jax.block_until_ready(clamp_pallas(x_big, clamp_min, clamp_max))
    ref_big = jnp.clip(x_big, clamp_min, clamp_max)
    assert y_big.shape == x_big.shape and y_big.dtype == x_big.dtype
    assert jnp.allclose(y_big, ref_big), "streaming-path mismatch vs reference clamp"

    print("KERNEL_OK")
</pallas_src>

<mosaic_0001>
module attributes {stable_mosaic.version = 11 : i64} {
  func.func @kernel(%arg0: memref<2x4x16x16xf32, #tpu.memory_space<vmem>>, %arg1: memref<2x4x16x16xf32, #tpu.memory_space<vmem>>) attributes {dimension_semantics = [], scalar_prefetch = 0 : i64, scratch_operands = 0 : i64, tpu.core_type = #tpu.core_type<tc>} {
    %c0 = arith.constant 0 : index
    %c0_0 = arith.constant 0 : index
    %c0_1 = arith.constant 0 : index
    %c0_2 = arith.constant 0 : index
    %0 = vector.load %arg0[%c0, %c0_0, %c0_1, %c0_2] : memref<2x4x16x16xf32, #tpu.memory_space<vmem>>, vector<2x4x16x16xf32>
    %cst = arith.constant -5.000000e-01 : f32
    %cst_3 = arith.constant 5.000000e-01 : f32
    %1 = vector.broadcast %cst : f32 to vector<2x4x16x16xf32>
    %2 = arith.maximumf %1, %0 : vector<2x4x16x16xf32>
    %3 = vector.broadcast %cst_3 : f32 to vector<2x4x16x16xf32>
    %4 = arith.minimumf %3, %2 : vector<2x4x16x16xf32>
    %c0_4 = arith.constant 0 : index
    %c0_5 = arith.constant 0 : index
    %c0_6 = arith.constant 0 : index
    %c0_7 = arith.constant 0 : index
    %5 = vector.load %arg1[%c0_4, %c0_5, %c0_6, %c0_7] : memref<2x4x16x16xf32, #tpu.memory_space<vmem>>, vector<2x4x16x16xf32>
    tpu.vector_store %arg1[%c0_4, %c0_5, %c0_6, %c0_7], %4 {strides = array<i32>} : memref<2x4x16x16xf32, #tpu.memory_space<vmem>>, vector<2x4x16x16xf32>,
    return
  }
}

</mosaic_0001>

<llo_original>
// kernel: tpu_custom_call.1
$region0: #{tpu_custom_call.1}
  #allocation0 [shape = 'u32[]', space=smem, size = 0x4, offset = 0x4, fixed_abs, tag = 'smem constant byte address 0x4 - core index']
  #allocation1 [shape = 'u32[72,128]{1,0:T(1,128)}', space=vmem, size = 0x9000, scoped, tag = 'internal scratch']
  %s0 = inlined_call_operand.hbm [shape: f32[2,4,16,16], index: 0, kind: input, shape index: {}]
  %s1 = inlined_call_operand.hbm [shape: f32[2,4,16,16], index: 1, kind: output, shape index: {}]
  %s2 = sld [smem:[#allocation0]]
  $region18: #{tpu_custom_call.1} parent=0
    _
  %s4 = ssub.s32 1, %s2
  %s5 = scalar_select 0, %s4, %s2
  $region1: #{tpu_custom_call.1} parent=0
    #allocation2 [shape = 'u8[65536]{0}', space=vmem, size = 0x10000, scoped, tag = 'input window, operand 0, single buffered']
    #allocation3 [shape = 's32[1]{0}', space=sflag, size = 0x4, scoped, tag = 'scoped memory for tpu_custom_call.1']
    #allocation4 [shape = 's32[1]{0}', space=sflag, size = 0x4, scoped, tag = 'scoped memory for tpu_custom_call.1']
    #allocation5 [shape = 'u8[65536]{0}', space=vmem, size = 0x10000, scoped, tag = 'output window, operand 0, single buffered']
    %6 = vsyncpa [#allocation3], 0
    %7 = vsyncpa [#allocation4], 0
    // Predicated region
    $region2: #{tpu_custom_call.1} parent=1 // pred_check
      _
    $region3: #{tpu_custom_call.1} parent=1 // pred_check_branch
      %9 = sbr.rel (0) target = $region5
    $region4: #{tpu_custom_call.1} parent=1 // pred_region
      %11 = vsyncadd [#allocation3], 0
      %s12 = sshll.u32 %s0, 4
      %s13 = int_to_ptr.hbm [resolvable:$true] %s12
      %s14 = sshll.u32 [#allocation2], 4
      %s15 = int_to_ptr.vmem [resolvable:$true] %s14
      %20 = dma.hbm_to_vmem [thread:$0]  %s13, 2048, %s15, [#allocation3], 128, 128, 8
    $region5: #{tpu_custom_call.1} parent=1 // pred_fallthru
      _
    // Predicated region
    $region6: #{tpu_custom_call.1} parent=1 // pred_check
      _
    $region7: #{tpu_custom_call.1} parent=1 // pred_check_branch
      %22 = sbr.rel (0) target = $region9
    $region8: #{tpu_custom_call.1} parent=1 // pred_region
      %24 = dma.done [#allocation3], 2048
    $region9: #{tpu_custom_call.1} parent=1 // pred_fallthru
      _
    %v25 = vld [vmem:[#allocation2] sm:$0xff]
    %v26 = vld [vmem:[#allocation2 + $0x8] sm:$0xff]
    %v27 = vld [vmem:[#allocation2 + $0x10] sm:$0xff]
    %v28 = vld [vmem:[#allocation2 + $0x18] sm:$0xff]
    %v29 = vld [vmem:[#allocation2 + $0x20] sm:$0xff]
    %v30 = vld [vmem:[#allocation2 + $0x28] sm:$0xff]
    %v31 = vld [vmem:[#allocation2 + $0x30] sm:$0xff]
    %v32 = vld [vmem:[#allocation2 + $0x38] sm:$0xff]
    %v33 = vld [vmem:[#allocation2 + $0x40] sm:$0xff]
    %v34 = vld [vmem:[#allocation2 + $0x48] sm:$0xff]
    %v35 = vld [vmem:[#allocation2 + $0x50] sm:$0xff]
    %v36 = vld [vmem:[#allocation2 + $0x58] sm:$0xff]
    %v37 = vld [vmem:[#allocation2 + $0x60] sm:$0xff]
    %v38 = vld [vmem:[#allocation2 + $0x68] sm:$0xff]
    %v39 = vld [vmem:[#allocation2 + $0x70] sm:$0xff]
    %v40 = vld [vmem:[#allocation2 + $0x78] sm:$0xff]
    %v41 = vmax.f32 %v25, -0.5
    %v42 = vmax.f32 %v26, -0.5
    %v43 = vmax.f32 %v27, -0.5
    %v44 = vmax.f32 %v28, -0.5
    %v45 = vmax.f32 %v29, -0.5
    %v46 = vmax.f32 %v30, -0.5
    %v47 = vmax.f32 %v31, -0.5
    %v48 = vmax.f32 %v32, -0.5
    %v49 = vmax.f32 %v33, -0.5
    %v50 = vmax.f32 %v34, -0.5
    %v51 = vmax.f32 %v35, -0.5
    %v52 = vmax.f32 %v36, -0.5
    %v53 = vmax.f32 %v37, -0.5
    %v54 = vmax.f32 %v38, -0.5
    %v55 = vmax.f32 %v39, -0.5
    %v56 = vmax.f32 %v40, -0.5
    %v57 = vmin.f32 %v41, 0.5
    %v58 = vmin.f32 %v42, 0.5
    %v59 = vmin.f32 %v43, 0.5
    %v60 = vmin.f32 %v44, 0.5
    %v61 = vmin.f32 %v45, 0.5
    %v62 = vmin.f32 %v46, 0.5
    %v63 = vmin.f32 %v47, 0.5
    %v64 = vmin.f32 %v48, 0.5
    %v65 = vmin.f32 %v49, 0.5
    %v66 = vmin.f32 %v50, 0.5
    %v67 = vmin.f32 %v51, 0.5
    %v68 = vmin.f32 %v52, 0.5
    %v69 = vmin.f32 %v53, 0.5
    %v70 = vmin.f32 %v54, 0.5
    %v71 = vmin.f32 %v55, 0.5
    %v72 = vmin.f32 %v56, 0.5
    %vm73 = vcmask 130048
    %74 = vst.msk [vmem:[#allocation5] sm:$0xff] %vm73, %v57
    %75 = vst.msk [vmem:[#allocation5 + $0x8] sm:$0xff] %vm73, %v58
    %76 = vst.msk [vmem:[#allocation5 + $0x10] sm:$0xff] %vm73, %v59
    %77 = vst.msk [vmem:[#allocation5 + $0x18] sm:$0xff] %vm73, %v60
    %78 = vst.msk [vmem:[#allocation5 + $0x20] sm:$0xff] %vm73, %v61
    %79 = vst.msk [vmem:[#allocation5 + $0x28] sm:$0xff] %vm73, %v62
    %80 = vst.msk [vmem:[#allocation5 + $0x30] sm:$0xff] %vm73, %v63
    %81 = vst.msk [vmem:[#allocation5 + $0x38] sm:$0xff] %vm73, %v64
    %82 = vst.msk [vmem:[#allocation5 + $0x40] sm:$0xff] %vm73, %v65
    %83 = vst.msk [vmem:[#allocation5 + $0x48] sm:$0xff] %vm73, %v66
    %84 = vst.msk [vmem:[#allocation5 + $0x50] sm:$0xff] %vm73, %v67
    %85 = vst.msk [vmem:[#allocation5 + $0x58] sm:$0xff] %vm73, %v68
    %86 = vst.msk [vmem:[#allocation5 + $0x60] sm:$0xff] %vm73, %v69
    %87 = vst.msk [vmem:[#allocation5 + $0x68] sm:$0xff] %vm73, %v70
    %88 = vst.msk [vmem:[#allocation5 + $0x70] sm:$0xff] %vm73, %v71
    %89 = vst.msk [vmem:[#allocation5 + $0x78] sm:$0xff] %vm73, %v72
    // Predicated region
    $region10: #{tpu_custom_call.1} parent=1 // pred_check
      _
    $region11: #{tpu_custom_call.1} parent=1 // pred_check_branch
      %91 = sbr.rel (0) target = $region13
    $region12: #{tpu_custom_call.1} parent=1 // pred_region
      %93 = vsyncadd [#allocation4], 0
      %s94 = sshll.u32 [#allocation5], 4
      %s95 = int_to_ptr.vmem [resolvable:$true] %s94
      %s96 = sshll.u32 %s1, 4
      %s97 = int_to_ptr.hbm [resolvable:$true] %s96
      %102 = dma.vmem_to_hbm [thread:$0]  %s95, 2048, %s97, [#allocation4], 128, 128, 8
    $region13: #{tpu_custom_call.1} parent=1 // pred_fallthru
      _
    // Predicated region
    $region14: #{tpu_custom_call.1} parent=1 // pred_check
      _
    $region15: #{tpu_custom_call.1} parent=1 // pred_check_branch
      %104 = sbr.rel (0) target = $region17
    $region16: #{tpu_custom_call.1} parent=1 // pred_region
      %106 = dma.done [#allocation4], 2048
    $region17: #{tpu_custom_call.1} parent=1 // pred_fallthru
      _
    %107 = vsyncpa [#allocation3], 1
    %108 = vsyncpa [#allocation4], 1

</llo_original>
